<compile_context>
chip_gen: v5e
topology: v5e:2x2
jax: 0.10.0
libtpu: 0.0.40
codegen_flags: <defaults>
</compile_context>

<pallas_src>
import jax
import jax.numpy as jnp
from jax.experimental import pallas as pl
from jax.experimental.pallas import tpu as pltpu


def _round_up(x, m):
    return ((x + m - 1) // m) * m


def _padded_vmem_bytes(shape, dtype):
    """Bytes of one VMEM buffer for `shape`, accounting for (sublane, 128) tiling."""
    itemsize = jnp.dtype(dtype).itemsize
    sublane = 32 // itemsize  # f32 -> 8, bf16 -> 16
    if len(shape) == 1:
        rows, cols = 1, shape[0]
        lead = 1
    else:
        rows, cols = shape[-2], shape[-1]
        lead = 1
        for d in shape[:-2]:
            lead *= d
    return lead * _round_up(rows, sublane) * _round_up(max(cols, 1), 128) * itemsize


def _cross_dot_kernel(x_ref, w_ref, o_ref):
    # x_ref: [TN, 3*Cin]  in vec's dtype (typically f32, straight from HBM)
    # w_ref: [3*Cin, 6*H] block-diagonal fused weight (compute dtype), resident
    # o_ref: [TN, H]
    h = w_ref.shape[1] // 6
    x = x_ref[...].astype(w_ref.dtype)          # in-kernel cast for the MXU (VPU slack)
    lr = jnp.dot(x, w_ref[...], preferred_element_type=jnp.float32)   # [TN, 6H]
    # Per-axis multiply-accumulate: columns [2kH : 2kH+H] = left_k, [2kH+H : 2(k+1)H] = right_k.
    acc = lr[:, 0 * h:1 * h] * lr[:, 1 * h:2 * h]
    acc = acc + lr[:, 2 * h:3 * h] * lr[:, 3 * h:4 * h]
    acc = acc + lr[:, 4 * h:5 * h] * lr[:, 5 * h:6 * h]
    o_ref[...] = acc.astype(o_ref.dtype)
    # NOTE: for H < 128 the slices / stores are lane-masked; the kernel is HBM-bound
    # so the VPU/XLU/store slots have slack.  Padding H to 128 in the fused weight is
    # the next lever only if the store path ever shows up in a profile.


def linear_fc_cross_product(vec, w_left, w_right, *, tile_n=2048,
                            compute_dtype=jnp.bfloat16, out_dtype=None,
                            vmem_budget_bytes=None):
    """vec: [N, 3, Cin]; w_left/w_right: [H, Cin] (nn.Linear weight layout).

    Returns cross_dot: [N, H] = sum over xyz of (vec @ Wl.T) * (vec @ Wr.T).
    """
    N, three, Cin = vec.shape
    assert three == 3
    H, Cin2 = w_left.shape
    assert Cin2 == Cin and w_right.shape == (H, Cin)

    if out_dtype is None:
        out_dtype = compute_dtype
    in_dtype = vec.dtype

    # ---- VMEM budget: derive from the actual chip (v5e/v6e: 128 MiB, v7x: 64 MiB).
    if vmem_budget_bytes is None:
        try:
            phys_vmem = pltpu.get_tpu_info().vmem_capacity_bytes
        except Exception:
            phys_vmem = 64 * 1024 * 1024  # conservative (v7x-sized) fallback
        vmem_budget_bytes = int(phys_vmem * 0.45)

    # ---- Tile selection.
    # Per-grid-step overhead ~0.35us => use big tiles; keep >=2 steps for dual-TC
    # sharding when there is enough work; balance tiles so padding is small.
    min_tn = 16  # covers f32 (8) and bf16 (16) sublane tiling
    tn0 = max(min_tn, _round_up(min(tile_n, N), min_tn))
    n_tiles = pl.cdiv(N, tn0)
    if n_tiles == 1 and N > 1024:
        n_tiles = 2  # let the "parallel" axis shard across 2 TensorCores (v7x/megacore)
    tn = _round_up(pl.cdiv(N, n_tiles), min_tn)

    def footprint(t):
        # Every BlockSpec is double-buffered by default (including the "resident"
        # weight); also reserve room for the [t, 6H] f32 matmul intermediate.
        return (2 * _padded_vmem_bytes((t, 3 * Cin), in_dtype)
                + 2 * _padded_vmem_bytes((3 * Cin, 6 * H), compute_dtype)
                + 2 * _padded_vmem_bytes((t, H), out_dtype)
                + _padded_vmem_bytes((t, 6 * H), jnp.float32))

    while tn > min_tn and footprint(tn) > vmem_budget_bytes:
        tn = max(min_tn, _round_up(tn // 2, min_tn))
    # (If footprint(min_tn) still exceeds the budget -- extreme Cin/H -- we proceed
    # and let the explicit vmem_limit_bytes below give a clear compile-time error.)

    grid = (pl.cdiv(N, tn),)   # ragged last tile handled by Pallas (no pad, no slice)

    # ---- Inputs: free reshape, no transpose / pad / host cast.
    x2 = vec.reshape(N, 3 * Cin)

    # ---- Fused block-diagonal weight [3*Cin, 6*H]: block k = [Wl.T | Wr.T].
    wf = jnp.concatenate([w_left, w_right], axis=0).T            # [Cin, 2H]
    w_bd = jnp.kron(jnp.eye(3, dtype=wf.dtype), wf).astype(compute_dtype)  # [3Cin, 6H]

    flops = 2 * N * (3 * Cin) * (6 * H) + 5 * N * H
    bytes_accessed = (N * 3 * Cin * jnp.dtype(in_dtype).itemsize
                      + 3 * Cin * 6 * H * jnp.dtype(compute_dtype).itemsize
                      + N * H * jnp.dtype(out_dtype).itemsize)

    out = pl.pallas_call(
        _cross_dot_kernel,
        out_shape=jax.ShapeDtypeStruct((N, H), out_dtype),
        grid_spec=pltpu.PrefetchScalarGridSpec(
            num_scalar_prefetch=0,
            grid=grid,
            in_specs=[
                pl.BlockSpec((tn, 3 * Cin), lambda i: (i, 0)),
                pl.BlockSpec((3 * Cin, 6 * H), lambda i: (0, 0)),  # resident weight
            ],
            out_specs=pl.BlockSpec((tn, H), lambda i: (i, 0)),
        ),
        compiler_params=pltpu.CompilerParams(
            dimension_semantics=("parallel",),            # megacore / v7x dual-TC
            vmem_limit_bytes=int(vmem_budget_bytes),      # above v5e's 16 MiB default
        ),
        cost_estimate=pl.CostEstimate(
            flops=int(flops), transcendentals=0, bytes_accessed=int(bytes_accessed)),
    )(x2, w_bd)

    return out


def _reference(vec, w_left, w_right):
    vec_left = jnp.einsum("nkc,hc->nkh", vec, w_left)
    vec_right = jnp.einsum("nkc,hc->nkh", vec, w_right)
    return (vec_left * vec_right).sum(axis=1)


if __name__ == "__main__":
    # Small shapes consistent with the module.
    N = 16
    in_vec_dims = 32
    hidden_vec_dims = 64
    out_scalar_dims = 16   # linear_out exists in __init__ but its output is unused

    key = jax.random.PRNGKey(0)
    k_vec, k_wl, k_wr, k_wo = jax.random.split(key, 4)

    vec = jax.random.normal(k_vec, (N, 3, in_vec_dims), dtype=jnp.float32)

    # Deterministic "nn.Linear(bias=False)" weights: U(-1/sqrt(fan_in), 1/sqrt(fan_in)).
    bound = 1.0 / (in_vec_dims ** 0.5)
    w_left = jax.random.uniform(k_wl, (hidden_vec_dims, in_vec_dims),
                                minval=-bound, maxval=bound, dtype=jnp.float32)
    w_right = jax.random.uniform(k_wr, (hidden_vec_dims, in_vec_dims),
                                 minval=-bound, maxval=bound, dtype=jnp.float32)
    bound_o = 1.0 / (hidden_vec_dims ** 0.5)
    w_out = jax.random.uniform(k_wo, (out_scalar_dims, hidden_vec_dims),
                               minval=-bound_o, maxval=bound_o, dtype=jnp.float32)
    del w_out  # dead code in the reference forward (return value is cross_dot only)

    ref = _reference(vec, w_left, w_right)

    # f32 compute + f32 output: tight correctness check.
    out_f32 = jax.block_until_ready(
        linear_fc_cross_product(vec, w_left, w_right, compute_dtype=jnp.float32))
    assert out_f32.shape == (N, hidden_vec_dims)
    assert out_f32.dtype == jnp.float32
    assert jnp.allclose(out_f32, ref, atol=1e-3, rtol=1e-3), "f32 kernel mismatch vs reference"

    # Default path: f32 input read straight from HBM, in-kernel bf16 cast for the MXU,
    # f32 accumulation, bf16 output (minimal HBM traffic).
    out_bf16 = jax.block_until_ready(linear_fc_cross_product(vec, w_left, w_right))
    assert out_bf16.shape == (N, hidden_vec_dims)
    assert out_bf16.dtype == jnp.bfloat16
    assert jnp.allclose(out_bf16.astype(jnp.float32), ref, atol=5e-2, rtol=5e-2), \
        "bf16 kernel mismatch vs reference"

    print("KERNEL_OK")
</pallas_src>

<mosaic_0001>
module attributes {stable_mosaic.version = 11 : i64} {
  func.func @_cross_dot_kernel(%arg0: i32, %arg1: memref<16x96xf32, #tpu.memory_space<vmem>>, %arg2: memref<96x384xf32, #tpu.memory_space<vmem>>, %arg3: memref<16x64xf32, #tpu.memory_space<vmem>>) attributes {dimension_semantics = [#tpu.dimension_semantics<parallel>], iteration_bounds = array<i64: 1>, scalar_prefetch = 0 : i64, scratch_operands = 0 : i64, tpu.core_type = #tpu.core_type<tc>, window_params = [{transform_indices = @transform_0, window_bounds = array<i64: 16, 96>}, {pipeline_mode = #tpu.pipeline_mode<synchronous>, transform_indices = @transform_1, window_bounds = array<i64: 96, 384>}, {transform_indices = @transform_2, window_bounds = array<i64: 16, 64>}]} {
    %c0 = arith.constant 0 : index
    %c0_0 = arith.constant 0 : index
    %0 = vector.load %arg1[%c0, %c0_0] : memref<16x96xf32, #tpu.memory_space<vmem>>, vector<16x96xf32>
    %c0_1 = arith.constant 0 : index
    %c0_2 = arith.constant 0 : index
    %1 = vector.load %arg2[%c0_1, %c0_2] : memref<96x384xf32, #tpu.memory_space<vmem>>, vector<96x384xf32>
    %cst = arith.constant dense<0.000000e+00> : vector<16x384xf32>
    %2 = tpu.matmul %0, %1, %cst {dimension_numbers = #tpu.dot_dimension_numbers<[1], [0], [0], [1], [0, 0, 1, 1], [], []>} : vector<16x96xf32>, vector<96x384xf32>, vector<16x384xf32> -> vector<16x384xf32>
    %3 = vector.extract_strided_slice %2 {offsets = [0, 0], sizes = [16, 64], strides = [1, 1]} : vector<16x384xf32> to vector<16x64xf32>
    %4 = vector.extract_strided_slice %2 {offsets = [0, 64], sizes = [16, 64], strides = [1, 1]} : vector<16x384xf32> to vector<16x64xf32>
    %5 = arith.mulf %3, %4 : vector<16x64xf32>
    %6 = vector.extract_strided_slice %2 {offsets = [0, 128], sizes = [16, 64], strides = [1, 1]} : vector<16x384xf32> to vector<16x64xf32>
    %7 = vector.extract_strided_slice %2 {offsets = [0, 192], sizes = [16, 64], strides = [1, 1]} : vector<16x384xf32> to vector<16x64xf32>
    %8 = arith.mulf %6, %7 : vector<16x64xf32>
    %9 = arith.addf %5, %8 : vector<16x64xf32>
    %10 = vector.extract_strided_slice %2 {offsets = [0, 256], sizes = [16, 64], strides = [1, 1]} : vector<16x384xf32> to vector<16x64xf32>
    %11 = vector.extract_strided_slice %2 {offsets = [0, 320], sizes = [16, 64], strides = [1, 1]} : vector<16x384xf32> to vector<16x64xf32>
    %12 = arith.mulf %10, %11 : vector<16x64xf32>
    %13 = arith.addf %9, %12 : vector<16x64xf32>
    %c0_3 = arith.constant 0 : index
    %c0_4 = arith.constant 0 : index
    %14 = vector.load %arg3[%c0_3, %c0_4] : memref<16x64xf32, #tpu.memory_space<vmem>>, vector<16x64xf32>
    tpu.vector_store %arg3[%c0_3, %c0_4], %13 {strides = array<i32>} : memref<16x64xf32, #tpu.memory_space<vmem>>, vector<16x64xf32>,
    return
  }
  func.func @transform_0(%arg0: i32) -> (i32, i32) {
    %c0_i32 = arith.constant 0 : i32
    %c0_i32_0 = arith.constant 0 : i32
    return %arg0, %c0_i32 : i32, i32
  }
  func.func @transform_1(%arg0: i32) -> (i32, i32) {
    %c0_i32 = arith.constant 0 : i32
    %c0_i32_0 = arith.constant 0 : i32
    %c0_i32_1 = arith.constant 0 : i32
    return %c0_i32, %c0_i32_0 : i32, i32
  }
  func.func @transform_2(%arg0: i32) -> (i32, i32) {
    %c0_i32 = arith.constant 0 : i32
    %c0_i32_0 = arith.constant 0 : i32
    return %arg0, %c0_i32 : i32, i32
  }
}

</mosaic_0001>

<llo_original>
// kernel: tpu_custom_call.1
$region0: #{tpu_custom_call.1}
  #allocation0 [shape = 'u32[]', space=smem, size = 0x4, offset = 0x4, fixed_abs, tag = 'smem constant byte address 0x4 - core index']
  #allocation1 [shape = 'u32[72,128]{1,0:T(1,128)}', space=vmem, size = 0x9000, scoped, tag = 'internal scratch']
  %s0 = inlined_call_operand.hbm [shape: f32[16,96], index: 0, kind: input, shape index: {}]
  %s1 = inlined_call_operand.hbm [shape: f32[96,384], index: 1, kind: input, shape index: {}]
  %s2 = inlined_call_operand.hbm [shape: f32[16,64], index: 2, kind: output, shape index: {}]
  %s3 = sld [smem:[#allocation0]]
  $region26: #{tpu_custom_call.1} parent=0
    _
  %s5 = ssub.s32 1, %s3
  %s6 = scalar_select 0, %s5, %s3
  $region1: #{tpu_custom_call.1} parent=0
    #allocation2 [shape = 'u8[8192]{0}', space=vmem, size = 0x2000, scoped, tag = 'input window, operand 0, single buffered']
    #allocation3 [shape = 's32[1]{0}', space=sflag, size = 0x4, scoped, tag = 'scoped memory for tpu_custom_call.1']
    #allocation4 [shape = 's32[1]{0}', space=sflag, size = 0x4, scoped, tag = 'scoped memory for tpu_custom_call.1']
    #allocation5 [shape = 'u8[147456]{0}', space=vmem, size = 0x24000, scoped, tag = 'input window, operand 1, single buffered']
    #allocation6 [shape = 's32[1]{0}', space=sflag, size = 0x4, scoped, tag = 'scoped memory for tpu_custom_call.1']
    #allocation7 [shape = 'u8[8192]{0}', space=vmem, size = 0x2000, scoped, tag = 'output window, operand 0, single buffered']
    %7 = vsyncpa [#allocation3], 0
    %8 = vsyncpa [#allocation6], 0
    %9 = vsyncpa [#allocation4], 0
    // Predicated region
    $region2: #{tpu_custom_call.1} parent=1 // pred_check
      _
    $region3: #{tpu_custom_call.1} parent=1 // pred_check_branch
      %11 = sbr.rel (0) target = $region5
    $region4: #{tpu_custom_call.1} parent=1 // pred_region
      %13 = vsyncadd [#allocation3], 0
      %s14 = sshll.u32 %s0, 4
      %s15 = int_to_ptr.hbm [resolvable:$true] %s14
      %s16 = sshll.u32 [#allocation2], 4
      %s17 = int_to_ptr.vmem [resolvable:$true] %s16
      %22 = dma.hbm_to_vmem [thread:$0]  %s15, 256, %s17, [#allocation3], 128, 128, 8
    $region5: #{tpu_custom_call.1} parent=1 // pred_fallthru
      _
    // Predicated region
    $region6: #{tpu_custom_call.1} parent=1 // pred_check
      _
    $region7: #{tpu_custom_call.1} parent=1 // pred_check_branch
      %24 = sbr.rel (0) target = $region9
    $region8: #{tpu_custom_call.1} parent=1 // pred_region
      %26 = vsyncadd [#allocation6], 0
      %s27 = sshll.u32 %s1, 4
      %s28 = int_to_ptr.hbm [resolvable:$true] %s27
      %s29 = sshll.u32 [#allocation5], 4
      %s30 = int_to_ptr.vmem [resolvable:$true] %s29
      %35 = dma.hbm_to_vmem [thread:$0]  %s28, 4608, %s30, [#allocation6], 384, 384, 24
    $region9: #{tpu_custom_call.1} parent=1 // pred_fallthru
      _
    // Predicated region
    $region10: #{tpu_custom_call.1} parent=1 // pred_check
      _
    $region11: #{tpu_custom_call.1} parent=1 // pred_check_branch
      %37 = sbr.rel (0) target = $region13
    $region12: #{tpu_custom_call.1} parent=1 // pred_region
      %39 = dma.done [#allocation3], 256
    $region13: #{tpu_custom_call.1} parent=1 // pred_fallthru
      _
    // Predicated region
    $region14: #{tpu_custom_call.1} parent=1 // pred_check
      _
    $region15: #{tpu_custom_call.1} parent=1 // pred_check_branch
      %41 = sbr.rel (0) target = $region17
    $region16: #{tpu_custom_call.1} parent=1 // pred_region
      %43 = dma.done [#allocation6], 4608
    $region17: #{tpu_custom_call.1} parent=1 // pred_fallthru
      _
    %v44 = vld [vmem:[#allocation2] sm:$0xff]
    %v45 = vld [vmem:[#allocation2 + $0x8] sm:$0xff]
    %v46 = vld [vmem:[#allocation5] sm:$0xff]
    %v47 = vld [vmem:[#allocation5 + $0x8] sm:$0xff]
    %v48 = vld [vmem:[#allocation5 + $0x10] sm:$0xff]
    %v49 = vld [vmem:[#allocation5 + $0x18] sm:$0xff]
    %v50 = vld [vmem:[#allocation5 + $0x20] sm:$0xff]
    %v51 = vld [vmem:[#allocation5 + $0x28] sm:$0xff]
    %v52 = vld [vmem:[#allocation5 + $0x30] sm:$0xff]
    %v53 = vld [vmem:[#allocation5 + $0x38] sm:$0xff]
    %v54 = vld [vmem:[#allocation5 + $0x40] sm:$0xff]
    %v55 = vld [vmem:[#allocation5 + $0x48] sm:$0xff]
    %v56 = vld [vmem:[#allocation5 + $0x50] sm:$0xff]
    %v57 = vld [vmem:[#allocation5 + $0x58] sm:$0xff]
    %v58 = vld [vmem:[#allocation5 + $0x60] sm:$0xff]
    %v59 = vld [vmem:[#allocation5 + $0x68] sm:$0xff]
    %v60 = vld [vmem:[#allocation5 + $0x70] sm:$0xff]
    %v61 = vld [vmem:[#allocation5 + $0x78] sm:$0xff]
    %v62 = vld [vmem:[#allocation5 + $0x80] sm:$0xff]
    %v63 = vld [vmem:[#allocation5 + $0x88] sm:$0xff]
    %v64 = vld [vmem:[#allocation5 + $0x90] sm:$0xff]
    %v65 = vld [vmem:[#allocation5 + $0x98] sm:$0xff]
    %v66 = vld [vmem:[#allocation5 + $0xa0] sm:$0xff]
    %v67 = vld [vmem:[#allocation5 + $0xa8] sm:$0xff]
    %v68 = vld [vmem:[#allocation5 + $0xb0] sm:$0xff]
    %v69 = vld [vmem:[#allocation5 + $0xb8] sm:$0xff]
    %v70 = vld [vmem:[#allocation5 + $0xc0] sm:$0xff]
    %v71 = vld [vmem:[#allocation5 + $0xc8] sm:$0xff]
    %v72 = vld [vmem:[#allocation5 + $0xd0] sm:$0xff]
    %v73 = vld [vmem:[#allocation5 + $0xd8] sm:$0xff]
    %v74 = vld [vmem:[#allocation5 + $0xe0] sm:$0xff]
    %v75 = vld [vmem:[#allocation5 + $0xe8] sm:$0xff]
    %v76 = vld [vmem:[#allocation5 + $0xf0] sm:$0xff]
    %v77 = vld [vmem:[#allocation5 + $0xf8] sm:$0xff]
    %v78 = vld [vmem:[#allocation5 + $0x100] sm:$0xff]
    %v79 = vld [vmem:[#allocation5 + $0x108] sm:$0xff]
    %v80 = vld [vmem:[#allocation5 + $0x110] sm:$0xff]
    %v81 = vld [vmem:[#allocation5 + $0x118] sm:$0xff]
    %vm82 = vcmask 785408
    %v84 = vsel %vm82, %v44, 0
    %v87 = vsel %vm82, %v45, 0
    %89 = vmatpush.msra.mxu0 0.0
    %90 = vmatpush.msra.mxu0 0.0
    %91 = vmatpush.msra.mxu0 0.0
    %92 = vmatpush.msra.mxu0 0.0
    %93 = vmatpush.msra.mxu0 %v79
    %94 = vmatpush.msra.mxu0 %v76
    %95 = vmatpush.msra.mxu0 %v73
    %96 = vmatpush.msra.mxu0 %v70
    %97 = vmatpush.msra.mxu0 %v67
    %98 = vmatpush.msra.mxu0 %v64
    %99 = vmatpush.msra.mxu0 %v61
    %100 = vmatpush.msra.mxu0 %v58
    %101 = vmatpush.msra.mxu0 %v55
    %102 = vmatpush.msra.mxu0 %v52
    %103 = vmatpush.msra.mxu0 %v49
    %104 = vmatpush.msra.mxu0 %v46
    %105 = vmatmul.f32.gmra.mxu0 %v84
    %v106 = vpop.f32.mrf.mxu0
    %v107 = vadd.f32 0.0, %v106
    %108 = vmatmul.f32.gmra.mxu0 %v87
    %v109 = vpop.f32.mrf.mxu0
    %v110 = vadd.f32 0.0, %v109
    %111 = vdwg.mxu0
    %112 = vmatpush.msra.mxu0 0.0
    %113 = vmatpush.msra.mxu0 0.0
    %114 = vmatpush.msra.mxu0 0.0
    %115 = vmatpush.msra.mxu0 0.0
    %116 = vmatpush.msra.mxu0 %v80
    %117 = vmatpush.msra.mxu0 %v77
    %118 = vmatpush.msra.mxu0 %v74
    %119 = vmatpush.msra.mxu0 %v71
    %120 = vmatpush.msra.mxu0 %v68
    %121 = vmatpush.msra.mxu0 %v65
    %122 = vmatpush.msra.mxu0 %v62
    %123 = vmatpush.msra.mxu0 %v59
    %124 = vmatpush.msra.mxu0 %v56
    %125 = vmatpush.msra.mxu0 %v53
    %126 = vmatpush.msra.mxu0 %v50
    %127 = vmatpush.msra.mxu0 %v47
    %128 = vmatmul.f32.gmra.mxu0 %v84
    %v129 = vpop.f32.mrf.mxu0
    %v130 = vadd.f32 0.0, %v129
    %131 = vmatmul.f32.gmra.mxu0 %v87
    %v132 = vpop.f32.mrf.mxu0
    %v133 = vadd.f32 0.0, %v132
    %134 = vdwg.mxu0
    %135 = vmatpush.msra.mxu0 0.0
    %136 = vmatpush.msra.mxu0 0.0
    %137 = vmatpush.msra.mxu0 0.0
    %138 = vmatpush.msra.mxu0 0.0
    %139 = vmatpush.msra.mxu0 %v81
    %140 = vmatpush.msra.mxu0 %v78
    %141 = vmatpush.msra.mxu0 %v75
    %142 = vmatpush.msra.mxu0 %v72
    %143 = vmatpush.msra.mxu0 %v69
    %144 = vmatpush.msra.mxu0 %v66
    %145 = vmatpush.msra.mxu0 %v63
    %146 = vmatpush.msra.mxu0 %v60
    %147 = vmatpush.msra.mxu0 %v57
    %148 = vmatpush.msra.mxu0 %v54
    %149 = vmatpush.msra.mxu0 %v51
    %150 = vmatpush.msra.mxu0 %v48
    %151 = vmatmul.f32.gmra.mxu0 %v84
    %v152 = vpop.f32.mrf.mxu0
    %v153 = vadd.f32 0.0, %v152
    %154 = vmatmul.f32.gmra.mxu0 %v87
    %v155 = vpop.f32.mrf.mxu0
    %v156 = vadd.f32 0.0, %v155
    %157 = vdwg.mxu0
    %160 = vrot.lane.b32.xlu0 %v107, 64
    %v161 = vpop.permute.xlu0 %160
    %162 = vrot.lane.b32.xlu0 %v110, 64
    %v163 = vpop.permute.xlu0 %162
    %v166 = vmul.f32 %v107, %v161
    %v167 = vmul.f32 %v110, %v163
    %170 = vrot.lane.b32.xlu0 %v130, 64
    %v171 = vpop.permute.xlu0 %170
    %172 = vrot.lane.b32.xlu0 %v133, 64
    %v173 = vpop.permute.xlu0 %172
    %v176 = vmul.f32 %v130, %v171
    %v177 = vmul.f32 %v133, %v173
    %v178 = vadd.f32 %v166, %v176
    %v179 = vadd.f32 %v167, %v177
    %182 = vrot.lane.b32.xlu0 %v153, 64
    %v183 = vpop.permute.xlu0 %182
    %184 = vrot.lane.b32.xlu0 %v156, 64
    %v185 = vpop.permute.xlu0 %184
    %v188 = vmul.f32 %v153, %v183
    %v189 = vmul.f32 %v156, %v185
    %v190 = vadd.f32 %v178, %v188
    %v191 = vadd.f32 %v179, %v189
    %vm192 = vcmask 523264
    %193 = vst.msk [vmem:[#allocation7] sm:$0xff] %vm192, %v190
    %194 = vst.msk [vmem:[#allocation7 + $0x8] sm:$0xff] %vm192, %v191
    // Predicated region
    $region18: #{tpu_custom_call.1} parent=1 // pred_check
      _
    $region19: #{tpu_custom_call.1} parent=1 // pred_check_branch
      %196 = sbr.rel (0) target = $region21
    $region20: #{tpu_custom_call.1} parent=1 // pred_region
      %198 = vsyncadd [#allocation4], 0
      %s199 = sshll.u32 [#allocation7], 4
      %s200 = int_to_ptr.vmem [resolvable:$true] %s199
      %s201 = sshll.u32 %s2, 4
      %s202 = int_to_ptr.hbm [resolvable:$true] %s201
      %207 = dma.vmem_to_hbm [thread:$0]  %s200, 256, %s202, [#allocation4], 128, 128, 8
    $region21: #{tpu_custom_call.1} parent=1 // pred_fallthru
      _
    // Predicated region
    $region22: #{tpu_custom_call.1} parent=1 // pred_check
      _
    $region23: #{tpu_custom_call.1} parent=1 // pred_check_branch
      %209 = sbr.rel (0) target = $region25
    $region24: #{tpu_custom_call.1} parent=1 // pred_region
      %211 = dma.done [#allocation4], 256
    $region25: #{tpu_custom_call.1} parent=1 // pred_fallthru
      _
    %212 = vsyncpa [#allocation3], 1
    %213 = vsyncpa [#allocation6], 1
    %214 = vsyncpa [#allocation4], 1

</llo_original>
